<compile_context>
chip_gen: v6e
topology: v6e:2x2x1
jax: 0.10.0
libtpu: 0.0.40
codegen_flags: <defaults>
</compile_context>

<pallas_src>
import functools

import jax
import jax.numpy as jnp
from jax.experimental import pallas as pl
from jax.experimental.pallas import tpu as pltpu


def _round_up(n, m):
    return ((n + m - 1) // m) * m


def _actor_kernel(x_ref, w1_ref, b1_ref, w2_ref, b2_ref, w3_ref, b3_ref,
                  o_ref, *, action_bound):
    # bf16 operands into the MXU, f32 accumulation; relu/tanh in f32 (VPU/EUP).
    x = x_ref[...].astype(jnp.bfloat16)
    h1 = jnp.dot(x, w1_ref[...], preferred_element_type=jnp.float32) + b1_ref[...]
    h1 = jnp.maximum(h1, 0.0)
    h2 = jnp.dot(h1.astype(jnp.bfloat16), w2_ref[...],
                 preferred_element_type=jnp.float32) + b2_ref[...]
    h2 = jnp.maximum(h2, 0.0)
    z = jnp.dot(h2.astype(jnp.bfloat16), w3_ref[...],
                preferred_element_type=jnp.float32) + b3_ref[...]
    o_ref[...] = jnp.tanh(z) * jnp.float32(action_bound)


def actor_forward(x, packed_params, action_bound, action_dim):
    """x: (B, state_dim) f32; packed_params from pack_actor_params."""
    w1, b1, w2, b2, w3, b3 = packed_params
    B, S = x.shape
    H1, H2 = w1.shape[1], w2.shape[1]
    A_pad = w3.shape[1]

    # Sublane-align the batch dim; tile it at 128 rows for large batches so the
    # (resident) weights are reused across grid steps without re-DMA.
    tile_b = 128 if B > 128 else _round_up(B, 8)
    B_pad = _round_up(B, tile_b)
    if B_pad != B:
        x = jnp.pad(x, ((0, B_pad - B), (0, 0)))

    kernel = functools.partial(_actor_kernel, action_bound=float(action_bound))

    # Weights/biases: full-array blocks with a constant index_map -> DMA'd once,
    # VMEM-resident across all batch-grid steps.
    def resident(a):
        return pl.BlockSpec(a.shape, lambda i: (0,) * a.ndim)

    flops = 2 * B_pad * (S * H1 + H1 * H2 + H2 * A_pad)
    bytes_accessed = int(
        x.size * x.dtype.itemsize
        + sum(int(p.size) * p.dtype.itemsize for p in packed_params)
        + B_pad * A_pad * 4)

    out = pl.pallas_call(
        kernel,
        out_shape=jax.ShapeDtypeStruct((B_pad, A_pad), jnp.float32),
        grid=(B_pad // tile_b,),
        in_specs=[pl.BlockSpec((tile_b, S), lambda i: (i, 0)),
                  resident(w1), resident(b1),
                  resident(w2), resident(b2),
                  resident(w3), resident(b3)],
        out_specs=pl.BlockSpec((tile_b, A_pad), lambda i: (i, 0)),
        compiler_params=pltpu.CompilerParams(
            dimension_semantics=("parallel",),   # shard batch across TCs (v7x)
            vmem_limit_bytes=8 << 20),           # real footprint ~1-2 MiB
        cost_estimate=pl.CostEstimate(flops=flops,
                                      transcendentals=B_pad * A_pad,
                                      bytes_accessed=bytes_accessed),
    )(x, w1, b1, w2, b2, w3, b3)
    return out[:B, :action_dim]


def init_actor_params(key, state_dim, action_dim,
                      hidden_1=400, hidden_2=300, init_w=0.003):
    """Deterministic f32 init mirroring the PyTorch module.

    fan_in(size) in the reference uses size[0] == out_features of the weight,
    so W1 ~ U(-1/sqrt(hidden_1), ...), W2 ~ U(-1/sqrt(hidden_2), ...).
    Biases keep nn.Linear's default U(-1/sqrt(in_features), ...).
    Weights are stored transposed: (in_features, out_features).
    """
    ks = jax.random.split(key, 6)
    v1 = 1.0 / jnp.sqrt(jnp.float32(hidden_1))
    v2 = 1.0 / jnp.sqrt(jnp.float32(hidden_2))
    bb1 = 1.0 / jnp.sqrt(jnp.float32(state_dim))
    bb2 = 1.0 / jnp.sqrt(jnp.float32(hidden_1))
    bb3 = 1.0 / jnp.sqrt(jnp.float32(hidden_2))

    w1 = jax.random.uniform(ks[0], (state_dim, hidden_1), jnp.float32, -v1, v1)
    b1 = jax.random.uniform(ks[1], (1, hidden_1), jnp.float32, -bb1, bb1)
    w2 = jax.random.uniform(ks[2], (hidden_1, hidden_2), jnp.float32, -v2, v2)
    b2 = jax.random.uniform(ks[3], (1, hidden_2), jnp.float32, -bb2, bb2)
    w3 = jax.random.uniform(ks[4], (hidden_2, action_dim), jnp.float32,
                            -init_w, init_w)
    b3 = jax.random.uniform(ks[5], (1, action_dim), jnp.float32, -bb3, bb3)
    return (w1, b1, w2, b2, w3, b3)


def pack_actor_params(params, lane=128):
    """Zero-pad hidden/action dims to lane multiples and cast weights to bf16.

    Zero columns/rows + relu(0)=0 + zero bias pads keep the logical slice of
    the output unchanged (up to bf16 weight rounding).  Biases stay f32 (added
    to the f32 MXU accumulator).
    """
    w1, b1, w2, b2, w3, b3 = params
    S, H1 = w1.shape
    H2 = w2.shape[1]
    A = w3.shape[1]
    H1p, H2p, Ap = _round_up(H1, lane), _round_up(H2, lane), _round_up(A, lane)

    def pad(a, shape):
        return jnp.pad(a, [(0, t - s) for s, t in zip(a.shape, shape)])

    return (pad(w1, (S, H1p)).astype(jnp.bfloat16),
            pad(b1, (1, H1p)),
            pad(w2, (H1p, H2p)).astype(jnp.bfloat16),
            pad(b2, (1, H2p)),
            pad(w3, (H2p, Ap)).astype(jnp.bfloat16),
            pad(b3, (1, Ap)))


def actor_reference(x, params, action_bound):
    """Full-f32 reference (the PyTorch-equivalent forward)."""
    w1, b1, w2, b2, w3, b3 = params
    h1 = jnp.maximum(x @ w1 + b1, 0.0)
    h2 = jnp.maximum(h1 @ w2 + b2, 0.0)
    return jnp.tanh(h2 @ w3 + b3) * action_bound


def actor_reference_packed(x, packed_params, action_bound, action_dim):
    """Same bf16-in / f32-accumulate math as the kernel, for a tight check."""
    w1, b1, w2, b2, w3, b3 = packed_params
    xb = x.astype(jnp.bfloat16)
    h1 = jnp.maximum(jnp.dot(xb, w1, preferred_element_type=jnp.float32) + b1, 0.0)
    h2 = jnp.maximum(jnp.dot(h1.astype(jnp.bfloat16), w2,
                             preferred_element_type=jnp.float32) + b2, 0.0)
    z = jnp.dot(h2.astype(jnp.bfloat16), w3,
                preferred_element_type=jnp.float32) + b3
    return (jnp.tanh(z) * action_bound)[:, :action_dim]


if __name__ == "__main__":
    key = jax.random.PRNGKey(0)
    k_param, k_x = jax.random.split(key)

    batch, state_dim, action_dim = 2, 8, 4
    action_bound = 2.0

    params = init_actor_params(k_param, state_dim, action_dim)
    packed = pack_actor_params(params)
    x = jax.random.normal(k_x, (batch, state_dim), jnp.float32)

    out = actor_forward(x, packed, action_bound, action_dim)
    out = jax.block_until_ready(out)
    assert out.shape == (batch, action_dim)

    # Tight check against the kernel's own (padded, bf16-weight) math.
    ref_packed = actor_reference_packed(x, packed, action_bound, action_dim)
    assert jnp.allclose(out, ref_packed, atol=2e-3, rtol=1e-3), (out, ref_packed)

    # Loose check against the full-f32 PyTorch-equivalent forward.
    ref_f32 = actor_reference(x, params, action_bound)
    assert jnp.allclose(out, ref_f32, atol=5e-2, rtol=5e-2), (out, ref_f32)

    print("KERNEL_OK")
</pallas_src>

<mosaic_0001>
module attributes {stable_mosaic.version = 11 : i64} {
  func.func @_actor_kernel(%arg0: i32, %arg1: memref<8x8xf32, #tpu.memory_space<vmem>>, %arg2: memref<8x512xbf16, #tpu.memory_space<vmem>>, %arg3: memref<1x512xf32, #tpu.memory_space<vmem>>, %arg4: memref<512x384xbf16, #tpu.memory_space<vmem>>, %arg5: memref<1x384xf32, #tpu.memory_space<vmem>>, %arg6: memref<384x128xbf16, #tpu.memory_space<vmem>>, %arg7: memref<1x128xf32, #tpu.memory_space<vmem>>, %arg8: memref<8x128xf32, #tpu.memory_space<vmem>>) attributes {dimension_semantics = [#tpu.dimension_semantics<parallel>], iteration_bounds = array<i64: 1>, scalar_prefetch = 0 : i64, scratch_operands = 0 : i64, tpu.core_type = #tpu.core_type<tc>, window_params = [{transform_indices = @transform_0, window_bounds = array<i64: 8, 8>}, {pipeline_mode = #tpu.pipeline_mode<synchronous>, transform_indices = @transform_1, window_bounds = array<i64: 8, 512>}, {pipeline_mode = #tpu.pipeline_mode<synchronous>, transform_indices = @transform_2, window_bounds = array<i64: 1, 512>}, {pipeline_mode = #tpu.pipeline_mode<synchronous>, transform_indices = @transform_3, window_bounds = array<i64: 512, 384>}, {pipeline_mode = #tpu.pipeline_mode<synchronous>, transform_indices = @transform_4, window_bounds = array<i64: 1, 384>}, {pipeline_mode = #tpu.pipeline_mode<synchronous>, transform_indices = @transform_5, window_bounds = array<i64: 384, 128>}, {pipeline_mode = #tpu.pipeline_mode<synchronous>, transform_indices = @transform_6, window_bounds = array<i64: 1, 128>}, {transform_indices = @transform_7, window_bounds = array<i64: 8, 128>}]} {
    %c0 = arith.constant 0 : index
    %c0_0 = arith.constant 0 : index
    %0 = vector.load %arg1[%c0, %c0_0] : memref<8x8xf32, #tpu.memory_space<vmem>>, vector<8x8xf32>
    %1 = arith.truncf %0 : vector<8x8xf32> to vector<8x8xbf16>
    %c0_1 = arith.constant 0 : index
    %c0_2 = arith.constant 0 : index
    %2 = vector.load %arg2[%c0_1, %c0_2] : memref<8x512xbf16, #tpu.memory_space<vmem>>, vector<8x512xbf16>
    %cst = arith.constant dense<0.000000e+00> : vector<8x512xf32>
    %3 = tpu.matmul %1, %2, %cst {dimension_numbers = #tpu.dot_dimension_numbers<[1], [0], [0], [1], [0, 0, 1, 1], [], []>} : vector<8x8xbf16>, vector<8x512xbf16>, vector<8x512xf32> -> vector<8x512xf32>
    %c0_3 = arith.constant 0 : index
    %c0_4 = arith.constant 0 : index
    %4 = vector.load %arg3[%c0_3, %c0_4] : memref<1x512xf32, #tpu.memory_space<vmem>>, vector<1x512xf32>
    %5 = vector.broadcast %4 : vector<1x512xf32> to vector<8x512xf32>
    %6 = arith.addf %3, %5 : vector<8x512xf32>
    %cst_5 = arith.constant 0.000000e+00 : f32
    %7 = vector.broadcast %cst_5 : f32 to vector<8x512xf32>
    %8 = arith.maximumf %6, %7 : vector<8x512xf32>
    %9 = arith.truncf %8 : vector<8x512xf32> to vector<8x512xbf16>
    %c0_6 = arith.constant 0 : index
    %c0_7 = arith.constant 0 : index
    %10 = vector.load %arg4[%c0_6, %c0_7] : memref<512x384xbf16, #tpu.memory_space<vmem>>, vector<512x384xbf16>
    %cst_8 = arith.constant dense<0.000000e+00> : vector<8x384xf32>
    %11 = tpu.matmul %9, %10, %cst_8 {dimension_numbers = #tpu.dot_dimension_numbers<[1], [0], [0], [1], [0, 0, 1, 1], [], []>} : vector<8x512xbf16>, vector<512x384xbf16>, vector<8x384xf32> -> vector<8x384xf32>
    %c0_9 = arith.constant 0 : index
    %c0_10 = arith.constant 0 : index
    %12 = vector.load %arg5[%c0_9, %c0_10] : memref<1x384xf32, #tpu.memory_space<vmem>>, vector<1x384xf32>
    %13 = vector.broadcast %12 : vector<1x384xf32> to vector<8x384xf32>
    %14 = arith.addf %11, %13 : vector<8x384xf32>
    %cst_11 = arith.constant 0.000000e+00 : f32
    %15 = vector.broadcast %cst_11 : f32 to vector<8x384xf32>
    %16 = arith.maximumf %14, %15 : vector<8x384xf32>
    %17 = arith.truncf %16 : vector<8x384xf32> to vector<8x384xbf16>
    %c0_12 = arith.constant 0 : index
    %c0_13 = arith.constant 0 : index
    %18 = vector.load %arg6[%c0_12, %c0_13] : memref<384x128xbf16, #tpu.memory_space<vmem>>, vector<384x128xbf16>
    %cst_14 = arith.constant dense<0.000000e+00> : vector<8x128xf32>
    %19 = tpu.matmul %17, %18, %cst_14 {dimension_numbers = #tpu.dot_dimension_numbers<[1], [0], [0], [1], [0, 0, 1, 1], [], []>} : vector<8x384xbf16>, vector<384x128xbf16>, vector<8x128xf32> -> vector<8x128xf32>
    %c0_15 = arith.constant 0 : index
    %c0_16 = arith.constant 0 : index
    %20 = vector.load %arg7[%c0_15, %c0_16] : memref<1x128xf32, #tpu.memory_space<vmem>>, vector<1x128xf32>
    %21 = vector.broadcast %20 : vector<1x128xf32> to vector<8x128xf32>
    %22 = arith.addf %19, %21 : vector<8x128xf32>
    %23 = math.tanh %22 : vector<8x128xf32>
    %cst_17 = arith.constant 2.000000e+00 : f32
    %24 = vector.broadcast %cst_17 : f32 to vector<8x128xf32>
    %25 = arith.mulf %23, %24 : vector<8x128xf32>
    %c0_18 = arith.constant 0 : index
    %c0_19 = arith.constant 0 : index
    %26 = vector.load %arg8[%c0_18, %c0_19] : memref<8x128xf32, #tpu.memory_space<vmem>>, vector<8x128xf32>
    tpu.vector_store %arg8[%c0_18, %c0_19], %25 {strides = array<i32>} : memref<8x128xf32, #tpu.memory_space<vmem>>, vector<8x128xf32>,
    return
  }
  func.func @transform_0(%arg0: i32) -> (i32, i32) {
    %c0_i32 = arith.constant 0 : i32
    %c0_i32_0 = arith.constant 0 : i32
    return %arg0, %c0_i32 : i32, i32
  }
  func.func @transform_1(%arg0: i32) -> (i32, i32) {
    %c0_i32 = arith.constant 0 : i32
    %c0_i32_0 = arith.constant 0 : i32
    %c0_i32_1 = arith.constant 0 : i32
    return %c0_i32, %c0_i32_0 : i32, i32
  }
  func.func @transform_2(%arg0: i32) -> (i32, i32) {
    %c0_i32 = arith.constant 0 : i32
    %c0_i32_0 = arith.constant 0 : i32
    %c0_i32_1 = arith.constant 0 : i32
    return %c0_i32, %c0_i32_0 : i32, i32
  }
  func.func @transform_3(%arg0: i32) -> (i32, i32) {
    %c0_i32 = arith.constant 0 : i32
    %c0_i32_0 = arith.constant 0 : i32
    %c0_i32_1 = arith.constant 0 : i32
    return %c0_i32, %c0_i32_0 : i32, i32
  }
  func.func @transform_4(%arg0: i32) -> (i32, i32) {
    %c0_i32 = arith.constant 0 : i32
    %c0_i32_0 = arith.constant 0 : i32
    %c0_i32_1 = arith.constant 0 : i32
    return %c0_i32, %c0_i32_0 : i32, i32
  }
  func.func @transform_5(%arg0: i32) -> (i32, i32) {
    %c0_i32 = arith.constant 0 : i32
    %c0_i32_0 = arith.constant 0 : i32
    %c0_i32_1 = arith.constant 0 : i32
    return %c0_i32, %c0_i32_0 : i32, i32
  }
  func.func @transform_6(%arg0: i32) -> (i32, i32) {
    %c0_i32 = arith.constant 0 : i32
    %c0_i32_0 = arith.constant 0 : i32
    %c0_i32_1 = arith.constant 0 : i32
    return %c0_i32, %c0_i32_0 : i32, i32
  }
  func.func @transform_7(%arg0: i32) -> (i32, i32) {
    %c0_i32 = arith.constant 0 : i32
    %c0_i32_0 = arith.constant 0 : i32
    return %arg0, %c0_i32 : i32, i32
  }
}

</mosaic_0001>

<llo_original>
// kernel: tpu_custom_call.1
$region0: #{tpu_custom_call.1}
  #allocation0 [shape = 'u32[]', space=smem, size = 0x4, offset = 0x4, fixed_abs, tag = 'smem constant byte address 0x4 - core index']
  #allocation1 [shape = 'u32[144,128]{1,0:T(1,128)}', space=vmem, size = 0x12000, scoped, tag = 'internal scratch']
  %s0 = inlined_call_operand.hbm [shape: f32[8,8], index: 0, kind: input, shape index: {}]
  %s1 = inlined_call_operand.hbm [shape: bf16[8,512], index: 1, kind: input, shape index: {}]
  %s2 = inlined_call_operand.hbm [shape: f32[1,512], index: 2, kind: input, shape index: {}]
  %s3 = inlined_call_operand.hbm [shape: bf16[512,384], index: 3, kind: input, shape index: {}]
  %s4 = inlined_call_operand.vmem [shape: f32[1,384], index: 4, kind: input, shape index: {}]
  %s5 = inlined_call_operand.hbm [shape: bf16[384,128], index: 5, kind: input, shape index: {}]
  %s6 = inlined_call_operand.vmem [shape: f32[1,128], index: 6, kind: input, shape index: {}]
  %s7 = inlined_call_operand.hbm [shape: f32[8,128], index: 7, kind: output, shape index: {}]
  %s8 = sld [smem:[#allocation0]]
  $region58: #{tpu_custom_call.1} parent=0
    _
  %s10 = ssub.s32 1, %s8
  %s11 = scalar_select 0, %s10, %s8
  $region1: #{tpu_custom_call.1} parent=0
    #allocation2 [shape = 'u8[4096]{0}', space=vmem, size = 0x1000, scoped, tag = 'input window, operand 0, single buffered']
    #allocation3 [shape = 's32[1]{0}', space=sflag, size = 0x4, scoped, tag = 'scoped memory for tpu_custom_call.1']
    #allocation4 [shape = 's32[1]{0}', space=sflag, size = 0x4, scoped, tag = 'scoped memory for tpu_custom_call.1']
    #allocation5 [shape = 'u8[8192]{0}', space=vmem, size = 0x2000, scoped, tag = 'input window, operand 1, single buffered']
    #allocation6 [shape = 's32[1]{0}', space=sflag, size = 0x4, scoped, tag = 'scoped memory for tpu_custom_call.1']
    #allocation7 [shape = 'u8[2048]{0}', space=vmem, size = 0x800, scoped, tag = 'input window, operand 2, single buffered']
    #allocation8 [shape = 'u8[393216]{0}', space=vmem, size = 0x60000, scoped, tag = 'input window, operand 3, single buffered']
    #allocation9 [shape = 's32[1]{0}', space=sflag, size = 0x4, scoped, tag = 'scoped memory for tpu_custom_call.1']
    #allocation10 [shape = 'u8[98304]{0}', space=vmem, size = 0x18000, scoped, tag = 'input window, operand 5, single buffered']
    #allocation11 [shape = 'u8[4096]{0}', space=vmem, size = 0x1000, scoped, tag = 'output window, operand 0, single buffered']
    %12 = vsyncpa [#allocation3], 0
    %13 = vsyncpa [#allocation6], 0
    %14 = vsyncpa [#allocation9], 0
    %15 = vsyncpa [#allocation4], 0
    // Predicated region
    $region2: #{tpu_custom_call.1} parent=1 // pred_check
      _
    $region3: #{tpu_custom_call.1} parent=1 // pred_check_branch
      %17 = sbr.rel (0) target = $region5
    $region4: #{tpu_custom_call.1} parent=1 // pred_region
      %s19 = ssub.s32 128, 128
      %20 = vsyncadd [#allocation3], %s19
      %s22 = sshll.u32 [#allocation2], 4
      %s23 = int_to_ptr.vmem [resolvable:$true] %s22
      %25 = dma.hbm_to_vmem [thread:$0]  %s0, 128, %s23, [#allocation3]
    $region5: #{tpu_custom_call.1} parent=1 // pred_fallthru
      _
    // Predicated region
    $region6: #{tpu_custom_call.1} parent=1 // pred_check
      _
    $region7: #{tpu_custom_call.1} parent=1 // pred_check_branch
      %27 = sbr.rel (0) target = $region9
    $region8: #{tpu_custom_call.1} parent=1 // pred_region
      %s29 = ssub.s32 256, 256
      %30 = vsyncadd [#allocation6], %s29
      %s32 = sshll.u32 [#allocation5], 4
      %s33 = int_to_ptr.vmem [resolvable:$true] %s32
      %35 = dma.hbm_to_vmem [thread:$0]  %s1, 256, %s33, [#allocation6]
    $region9: #{tpu_custom_call.1} parent=1 // pred_fallthru
      _
    // Predicated region
    $region10: #{tpu_custom_call.1} parent=1 // pred_check
      _
    $region11: #{tpu_custom_call.1} parent=1 // pred_check_branch
      %37 = sbr.rel (0) target = $region13
    $region12: #{tpu_custom_call.1} parent=1 // pred_region
      %s39 = ssub.s32 64, 64
      %40 = vsyncadd [#allocation6], %s39
      %s42 = sshll.u32 [#allocation7], 4
      %s43 = int_to_ptr.vmem [resolvable:$true] %s42
      %45 = dma.hbm_to_vmem [thread:$0]  %s2, 64, %s43, [#allocation6]
    $region13: #{tpu_custom_call.1} parent=1 // pred_fallthru
      _
    // Predicated region
    $region14: #{tpu_custom_call.1} parent=1 // pred_check
      _
    $region15: #{tpu_custom_call.1} parent=1 // pred_check_branch
      %47 = sbr.rel (0) target = $region17
    $region16: #{tpu_custom_call.1} parent=1 // pred_region
      %s49 = ssub.s32 12288, 12288
      %50 = vsyncadd [#allocation9], %s49
      %s51 = sshll.u32 [#allocation8], 4
      %s52 = int_to_ptr.vmem [resolvable:$true] %s51
      %57 = dma.hbm_to_vmem [thread:$0]  %s3, 12288, %s52, [#allocation9], 192, 192, 12
    $region17: #{tpu_custom_call.1} parent=1 // pred_fallthru
      _
    // Predicated region
    $region18: #{tpu_custom_call.1} parent=1 // pred_check
      _
    $region19: #{tpu_custom_call.1} parent=1 // pred_check_branch
      %59 = sbr.rel (0) target = $region21
    $region20: #{tpu_custom_call.1} parent=1 // pred_region
      _
    $region21: #{tpu_custom_call.1} parent=1 // pred_fallthru
      _
    // Predicated region
    $region22: #{tpu_custom_call.1} parent=1 // pred_check
      _
    $region23: #{tpu_custom_call.1} parent=1 // pred_check_branch
      %61 = sbr.rel (0) target = $region25
    $region24: #{tpu_custom_call.1} parent=1 // pred_region
      %s63 = ssub.s32 3072, 3072
      %64 = vsyncadd [#allocation9], %s63
      %s65 = sshll.u32 [#allocation10], 4
      %s66 = int_to_ptr.vmem [resolvable:$true] %s65
      %71 = dma.hbm_to_vmem [thread:$0]  %s5, 3072, %s66, [#allocation9], 64, 64, 4
    $region25: #{tpu_custom_call.1} parent=1 // pred_fallthru
      _
    // Predicated region
    $region26: #{tpu_custom_call.1} parent=1 // pred_check
      _
    $region27: #{tpu_custom_call.1} parent=1 // pred_check_branch
      %73 = sbr.rel (0) target = $region29
    $region28: #{tpu_custom_call.1} parent=1 // pred_region
      _
    $region29: #{tpu_custom_call.1} parent=1 // pred_fallthru
      _
    // Predicated region
    $region30: #{tpu_custom_call.1} parent=1 // pred_check
      _
    $region31: #{tpu_custom_call.1} parent=1 // pred_check_branch
      %75 = sbr.rel (0) target = $region33
    $region32: #{tpu_custom_call.1} parent=1 // pred_region
      %76 = dma.done [#allocation3], 128
    $region33: #{tpu_custom_call.1} parent=1 // pred_fallthru
      _
    // Predicated region
    $region34: #{tpu_custom_call.1} parent=1 // pred_check
      _
    $region35: #{tpu_custom_call.1} parent=1 // pred_check_branch
      %78 = sbr.rel (0) target = $region37
    $region36: #{tpu_custom_call.1} parent=1 // pred_region
      %79 = dma.done [#allocation6], 256
    $region37: #{tpu_custom_call.1} parent=1 // pred_fallthru
      _
    // Predicated region
    $region38: #{tpu_custom_call.1} parent=1 // pred_check
      _
    $region39: #{tpu_custom_call.1} parent=1 // pred_check_branch
      %81 = sbr.rel (0) target = $region41
    $region40: #{tpu_custom_call.1} parent=1 // pred_region
      %82 = dma.done [#allocation6], 64
    $region41: #{tpu_custom_call.1} parent=1 // pred_fallthru
      _
    // Predicated region
    $region42: #{tpu_custom_call.1} parent=1 // pred_check
      _
    $region43: #{tpu_custom_call.1} parent=1 // pred_check_branch
      %84 = sbr.rel (0) target = $region45
    $region44: #{tpu_custom_call.1} parent=1 // pred_region
      %85 = dma.done [#allocation9], 12288
    $region45: #{tpu_custom_call.1} parent=1 // pred_fallthru
      _
    // Predicated region
    $region46: #{tpu_custom_call.1} parent=1 // pred_check
      _
    $region47: #{tpu_custom_call.1} parent=1 // pred_check_branch
      %87 = sbr.rel (0) target = $region49
    $region48: #{tpu_custom_call.1} parent=1 // pred_region
      %88 = dma.done [#allocation9], 3072
    $region49: #{tpu_custom_call.1} parent=1 // pred_fallthru
      _
    %v90 = vld [vmem:[#allocation2] sm:$0xff]
    %v91 = vpack.c.bf16 %v90, %v90
    %v92 = vld [vmem:[#allocation5] sm:$0xff]
    %v93 = vld [vmem:[#allocation5 + $0x8] sm:$0xff]
    %v94 = vld [vmem:[#allocation7] sm:$0xf]
    %v96 = vlaneseq
    %v97 = vshrl.u32 %v96, 7
    %v98 = vsub.s32 0, %v97
    %v99 = vrot.slane %v94, %v98
    %v100 = vlaneseq
    %v101 = vshrl.u32 %v100, 7
    %v102 = vsub.s32 1, %v101
    %v103 = vrot.slane %v94, %v102
    %v104 = vlaneseq
    %v105 = vshrl.u32 %v104, 7
    %v106 = vsub.s32 2, %v105
    %v107 = vrot.slane %v94, %v106
    %v108 = vlaneseq
    %v109 = vshrl.u32 %v108, 7
    %v110 = vsub.s32 3, %v109
    %v111 = vrot.slane %v94, %v110
    %v118 = vunpack.c.l.b16 %v92
    %v119 = vunpack.c.h.b16 %v92
    %v120 = vunpack.c.l.b16 %v93
    %v121 = vunpack.c.h.b16 %v93
    %v122 = vpack.c.b16 %v118, %v118
    %v123 = vpack.c.b16 %v119, %v119
    %v124 = vpack.c.b16 %v120, %v120
    %v125 = vpack.c.b16 %v121, %v121
    %vm126 = vcmask 64512
    %v128 = vsel %vm126, %v91, 0
    %vm130 = vcmask 1043456
    %v132 = vsel %vm130, %v122, 0
    %v135 = vsel %vm130, %v123, 0
    %v138 = vsel %vm130, %v124, 0
    %v141 = vsel %vm130, %v125, 0
    %143 = vmatprep.subr.bf16.mxu0 0
    %144 = vmatpush1.bf16.msra.mxu0 0
    %145 = vmatprep.subr.bf16.mxu0 0
    %146 = vmatpush1.bf16.msra.mxu0 0
    %147 = vmatprep.subr.bf16.mxu0 0
    %148 = vmatpush1.bf16.msra.mxu0 0
    %149 = vmatprep.subr.bf16.mxu0 0
    %150 = vmatpush1.bf16.msra.mxu0 0
    %151 = vmatprep.subr.bf16.mxu0 0
    %152 = vmatpush1.bf16.msra.mxu0 0
    %153 = vmatprep.subr.bf16.mxu0 0
    %154 = vmatpush1.bf16.msra.mxu0 0
    %155 = vmatprep.subr.bf16.mxu0 0
    %156 = vmatpush1.bf16.msra.mxu0 0
    %157 = vmatprep.subr.bf16.mxu0 %v135
    %158 = vmatpush1.bf16.msra.mxu0 %v132
    %159 = vmatprep.subr.bf16.mxu0 0
    %160 = vmatpush2.bf16.msra.mxu0 0
    %161 = vmatprep.subr.bf16.mxu0 0
    %162 = vmatpush2.bf16.msra.mxu0 0
    %163 = vmatprep.subr.bf16.mxu0 0
    %164 = vmatpush2.bf16.msra.mxu0 0
    %165 = vmatprep.subr.bf16.mxu0 0
    %166 = vmatpush2.bf16.msra.mxu0 0
    %167 = vmatprep.subr.bf16.mxu0 0
    %168 = vmatpush2.bf16.msra.mxu0 0
    %169 = vmatprep.subr.bf16.mxu0 0
    %170 = vmatpush2.bf16.msra.mxu0 0
    %171 = vmatprep.subr.bf16.mxu0 0
    %172 = vmatpush2.bf16.msra.mxu0 0
    %173 = vmatprep.subr.bf16.mxu0 0
    %174 = vmatpush2.bf16.msra.mxu0 0
    %175 = vmatprep.mubr.bf16.mxu0 0
    %176 = vmatmul.mubr.bf16.gmra.mxu0 %v128
    %v177 = vpop.f32.mrf.mxu0
    %v178 = vadd.f32 %v99, %v177
    %v179 = vpop.f32.mrf.mxu0
    %v180 = vadd.f32 %v103, %v179
    %v181 = vpop.f32.mrf.mxu0
    %v182 = vpop.f32.mrf.mxu0
    %183 = vdwg.mxu0
    %184 = vmatprep.subr.bf16.mxu0 0
    %185 = vmatpush1.bf16.msra.mxu0 0
    %186 = vmatprep.subr.bf16.mxu0 0
    %187 = vmatpush1.bf16.msra.mxu0 0
    %188 = vmatprep.subr.bf16.mxu0 0
    %189 = vmatpush1.bf16.msra.mxu0 0
    %190 = vmatprep.subr.bf16.mxu0 0
    %191 = vmatpush1.bf16.msra.mxu0 0
    %192 = vmatprep.subr.bf16.mxu0 0
    %193 = vmatpush1.bf16.msra.mxu0 0
    %194 = vmatprep.subr.bf16.mxu0 0
    %195 = vmatpush1.bf16.msra.mxu0 0
    %196 = vmatprep.subr.bf16.mxu0 0
    %197 = vmatpush1.bf16.msra.mxu0 0
    %198 = vmatprep.subr.bf16.mxu0 %v141
    %199 = vmatpush1.bf16.msra.mxu0 %v138
    %200 = vmatprep.subr.bf16.mxu0 0
    %201 = vmatpush2.bf16.msra.mxu0 0
    %202 = vmatprep.subr.bf16.mxu0 0
    %203 = vmatpush2.bf16.msra.mxu0 0
    %204 = vmatprep.subr.bf16.mxu0 0
    %205 = vmatpush2.bf16.msra.mxu0 0
    %206 = vmatprep.subr.bf16.mxu0 0
    %207 = vmatpush2.bf16.msra.mxu0 0
    %208 = vmatprep.subr.bf16.mxu0 0
    %209 = vmatpush2.bf16.msra.mxu0 0
    %210 = vmatprep.subr.bf16.mxu0 0
    %211 = vmatpush2.bf16.msra.mxu0 0
    %212 = vmatprep.subr.bf16.mxu0 0
    %213 = vmatpush2.bf16.msra.mxu0 0
    %214 = vmatprep.subr.bf16.mxu0 0
    %215 = vmatpush2.bf16.msra.mxu0 0
    %216 = vmatprep.mubr.bf16.mxu0 0
    %217 = vmatmul.mubr.bf16.gmra.mxu0 %v128
    %v218 = vpop.f32.mrf.mxu0
    %v219 = vadd.f32 %v107, %v218
    %v220 = vpop.f32.mrf.mxu0
    %v221 = vadd.f32 %v111, %v220
    %v222 = vpop.f32.mrf.mxu0
    %v223 = vpop.f32.mrf.mxu0
    %224 = vdwg.mxu0
    %v225 = vmax.f32 %v178, 0.0
    %v226 = vmax.f32 %v180, 0.0
    %v227 = vmax.f32 %v219, 0.0
    %v228 = vmax.f32 %v221, 0.0
    %v229 = vpack.c.bf16 %v225, %v225
    %v230 = vpack.c.bf16 %v226, %v226
    %v231 = vpack.c.bf16 %v227, %v227
    %v232 = vpack.c.bf16 %v228, %v228
    %v233 = vld [vmem:[#allocation8] sm:$0xff]
    %v234 = vld [vmem:[#allocation8 + $0x8] sm:$0xf]
    %v235 = vld [vmem:[#allocation8 + $0xc] sm:$0xff]
    %v236 = vld [vmem:[#allocation8 + $0x14] sm:$0xf]
    %v237 = vld [vmem:[#allocation8 + $0x18] sm:$0xff]
    %v238 = vld [vmem:[#allocation8 + $0x20] sm:$0xf]
    %v239 = vld [vmem:[#allocation8 + $0x24] sm:$0xff]
    %v240 = vld [vmem:[#allocation8 + $0x2c] sm:$0xf]
    %v241 = vld [vmem:[#allocation8 + $0x30] sm:$0xff]
    %v242 = vld [vmem:[#allocation8 + $0x38] sm:$0xf]
    %v243 = vld [vmem:[#allocation8 + $0x3c] sm:$0xff]
    %v244 = vld [vmem:[#allocation8 + $0x44] sm:$0xf]
    %v245 = vld [vmem:[#allocation8 + $0x48] sm:$0xff]
    %v246 = vld [vmem:[#allocation8 + $0x50] sm:$0xf]
    %v247 = vld [vmem:[#allocation8 + $0x54] sm:$0xff]
    %v248 = vld [vmem:[#allocation8 + $0x5c] sm:$0xf]
    %v249 = vld [vmem:[#allocation8 + $0x60] sm:$0xff]
    %v250 = vld [vmem:[#allocation8 + $0x68] sm:$0xf]
    %v251 = vld [vmem:[#allocation8 + $0x6c] sm:$0xff]
    %v252 = vld [vmem:[#allocation8 + $0x74] sm:$0xf]
    %v253 = vld [vmem:[#allocation8 + $0x78] sm:$0xff]
    %v254 = vld [vmem:[#allocation8 + $0x80] sm:$0xf]
    %v255 = vld [vmem:[#allocation8 + $0x84] sm:$0xff]
    %v256 = vld [vmem:[#allocation8 + $0x8c] sm:$0xf]
    %v257 = vld [vmem:[#allocation8 + $0x90] sm:$0xff]
    %v258 = vld [vmem:[#allocation8 + $0x98] sm:$0xf]
    %v259 = vld [vmem:[#allocation8 + $0x9c] sm:$0xff]
    %v260 = vld [vmem:[#allocation8 + $0xa4] sm:$0xf]
    %v261 = vld [vmem:[#allocation8 + $0xa8] sm:$0xff]
    %v262 = vld [vmem:[#allocation8 + $0xb0] sm:$0xf]
    %v263 = vld [vmem:[#allocation8 + $0xb4] sm:$0xff]
    %v264 = vld [vmem:[#allocation8 + $0xbc] sm:$0xf]
    %v265 = vld [vmem:[#allocation8 + $0xc0] sm:$0xff]
    %v266 = vld [vmem:[#allocation8 + $0xc8] sm:$0xf]
    %v267 = vld [vmem:[#allocation8 + $0xcc] sm:$0xff]
    %v268 = vld [vmem:[#allocation8 + $0xd4] sm:$0xf]
    %v269 = vld [vmem:[#allocation8 + $0xd8] sm:$0xff]
    %v270 = vld [vmem:[#allocation8 + $0xe0] sm:$0xf]
    %v271 = vld [vmem:[#allocation8 + $0xe4] sm:$0xff]
    %v272 = vld [vmem:[#allocation8 + $0xec] sm:$0xf]
    %v273 = vld [vmem:[#allocation8 + $0xf0] sm:$0xff]
    %v274 = vld [vmem:[#allocation8 + $0xf8] sm:$0xf]
    %v275 = vld [vmem:[#allocation8 + $0xfc] sm:$0xff]
    %v276 = vld [vmem:[#allocation8 + $0x104] sm:$0xf]
    %v277 = vld [vmem:[#allocation8 + $0x108] sm:$0xff]
    %v278 = vld [vmem:[#allocation8 + $0x110] sm:$0xf]
    %v279 = vld [vmem:[#allocation8 + $0x114] sm:$0xff]
    %v280 = vld [vmem:[#allocation8 + $0x11c] sm:$0xf]
    %v281 = vld [vmem:[#allocation8 + $0x120] sm:$0xff]
    %v282 = vld [vmem:[#allocation8 + $0x128] sm:$0xf]
    %v283 = vld [vmem:[#allocation8 + $0x12c] sm:$0xff]
    %v284 = vld [vmem:[#allocation8 + $0x134] sm:$0xf]
    %v285 = vld [vmem:[#allocation8 + $0x138] sm:$0xff]
    %v286 = vld [vmem:[#allocation8 + $0x140] sm:$0xf]
    %v287 = vld [vmem:[#allocation8 + $0x144] sm:$0xff]
    %v288 = vld [vmem:[#allocation8 + $0x14c] sm:$0xf]
    %v289 = vld [vmem:[#allocation8 + $0x150] sm:$0xff]
    %v290 = vld [vmem:[#allocation8 + $0x158] sm:$0xf]
    %v291 = vld [vmem:[#allocation8 + $0x15c] sm:$0xff]
    %v292 = vld [vmem:[#allocation8 + $0x164] sm:$0xf]
    %v293 = vld [vmem:[#allocation8 + $0x168] sm:$0xff]
    %v294 = vld [vmem:[#allocation8 + $0x170] sm:$0xf]
    %v295 = vld [vmem:[#allocation8 + $0x174] sm:$0xff]
    %v296 = vld [vmem:[#allocation8 + $0x17c] sm:$0xf]
    %v297 = vld [vmem:[#allocation8 + $0x180] sm:$0xff]
    %v298 = vld [vmem:[#allocation8 + $0x188] sm:$0xf]
    %v299 = vld [vmem:[#allocation8 + $0x18c] sm:$0xff]
    %v300 = vld [vmem:[#allocation8 + $0x194] sm:$0xf]
    %v301 = vld [vmem:[#allocation8 + $0x198] sm:$0xff]
    %v302 = vld [vmem:[#allocation8 + $0x1a0] sm:$0xf]
    %v303 = vld [vmem:[#allocation8 + $0x1a4] sm:$0xff]
    %v304 = vld [vmem:[#allocation8 + $0x1ac] sm:$0xf]
    %v305 = vld [vmem:[#allocation8 + $0x1b0] sm:$0xff]
    %v306 = vld [vmem:[#allocation8 + $0x1b8] sm:$0xf]
    %v307 = vld [vmem:[#allocation8 + $0x1bc] sm:$0xff]
    %v308 = vld [vmem:[#allocation8 + $0x1c4] sm:$0xf]
    %v309 = vld [vmem:[#allocation8 + $0x1c8] sm:$0xff]
    %v310 = vld [vmem:[#allocation8 + $0x1d0] sm:$0xf]
    %v311 = vld [vmem:[#allocation8 + $0x1d4] sm:$0xff]
    %v312 = vld [vmem:[#allocation8 + $0x1dc] sm:$0xf]
    %v313 = vld [vmem:[#allocation8 + $0x1e0] sm:$0xff]
    %v314 = vld [vmem:[#allocation8 + $0x1e8] sm:$0xf]
    %v315 = vld [vmem:[#allocation8 + $0x1ec] sm:$0xff]
    %v316 = vld [vmem:[#allocation8 + $0x1f4] sm:$0xf]
    %v317 = vld [vmem:[#allocation8 + $0x1f8] sm:$0xff]
    %v318 = vld [vmem:[#allocation8 + $0x200] sm:$0xf]
    %v319 = vld [vmem:[#allocation8 + $0x204] sm:$0xff]
    %v320 = vld [vmem:[#allocation8 + $0x20c] sm:$0xf]
    %v321 = vld [vmem:[#allocation8 + $0x210] sm:$0xff]
    %v322 = vld [vmem:[#allocation8 + $0x218] sm:$0xf]
    %v323 = vld [vmem:[#allocation8 + $0x21c] sm:$0xff]
    %v324 = vld [vmem:[#allocation8 + $0x224] sm:$0xf]
    %v325 = vld [vmem:[#allocation8 + $0x228] sm:$0xff]
    %v326 = vld [vmem:[#allocation8 + $0x230] sm:$0xf]
    %v327 = vld [vmem:[#allocation8 + $0x234] sm:$0xff]
    %v328 = vld [vmem:[#allocation8 + $0x23c] sm:$0xf]
    %v329 = vld [vmem:[#allocation8 + $0x240] sm:$0xff]
    %v330 = vld [vmem:[#allocation8 + $0x248] sm:$0xf]
    %v331 = vld [vmem:[#allocation8 + $0x24c] sm:$0xff]
    %v332 = vld [vmem:[#allocation8 + $0x254] sm:$0xf]
    %v333 = vld [vmem:[#allocation8 + $0x258] sm:$0xff]
    %v334 = vld [vmem:[#allocation8 + $0x260] sm:$0xf]
    %v335 = vld [vmem:[#allocation8 + $0x264] sm:$0xff]
    %v336 = vld [vmem:[#allocation8 + $0x26c] sm:$0xf]
    %v337 = vld [vmem:[#allocation8 + $0x270] sm:$0xff]
    %v338 = vld [vmem:[#allocation8 + $0x278] sm:$0xf]
    %v339 = vld [vmem:[#allocation8 + $0x27c] sm:$0xff]
    %v340 = vld [vmem:[#allocation8 + $0x284] sm:$0xf]
    %v341 = vld [vmem:[#allocation8 + $0x288] sm:$0xff]
    %v342 = vld [vmem:[#allocation8 + $0x290] sm:$0xf]
    %v343 = vld [vmem:[#allocation8 + $0x294] sm:$0xff]
    %v344 = vld [vmem:[#allocation8 + $0x29c] sm:$0xf]
    %v345 = vld [vmem:[#allocation8 + $0x2a0] sm:$0xff]
    %v346 = vld [vmem:[#allocation8 + $0x2a8] sm:$0xf]
    %v347 = vld [vmem:[#allocation8 + $0x2ac] sm:$0xff]
    %v348 = vld [vmem:[#allocation8 + $0x2b4] sm:$0xf]
    %v349 = vld [vmem:[#allocation8 + $0x2b8] sm:$0xff]
    %v350 = vld [vmem:[#allocation8 + $0x2c0] sm:$0xf]
    %v351 = vld [vmem:[#allocation8 + $0x2c4] sm:$0xff]
    %v352 = vld [vmem:[#allocation8 + $0x2cc] sm:$0xf]
    %v353 = vld [vmem:[#allocation8 + $0x2d0] sm:$0xff]
    %v354 = vld [vmem:[#allocation8 + $0x2d8] sm:$0xf]
    %v355 = vld [vmem:[#allocation8 + $0x2dc] sm:$0xff]
    %v356 = vld [vmem:[#allocation8 + $0x2e4] sm:$0xf]
    %v357 = vld [vmem:[#allocation8 + $0x2e8] sm:$0xff]
    %v358 = vld [vmem:[#allocation8 + $0x2f0] sm:$0xf]
    %v359 = vld [vmem:[#allocation8 + $0x2f4] sm:$0xff]
    %v360 = vld [vmem:[#allocation8 + $0x2fc] sm:$0xf]
    %v361 = vld [vmem:[%s4] sm:$0x7]
    %v363 = vlaneseq
    %v364 = vshrl.u32 %v363, 7
    %v365 = vsub.s32 0, %v364
    %v366 = vrot.slane %v361, %v365
    %v367 = vlaneseq
    %v368 = vshrl.u32 %v367, 7
    %v369 = vsub.s32 1, %v368
    %v370 = vrot.slane %v361, %v369
    %v371 = vlaneseq
    %v372 = vshrl.u32 %v371, 7
    %v373 = vsub.s32 2, %v372
    %v374 = vrot.slane %v361, %v373
    %v506 = vunpack.c.l.b16 %v233
    %v507 = vunpack.c.h.b16 %v233
    %v508 = vunpack.c.l.b16 %v234
    %v509 = vunpack.c.l.b16 %v235
    %v510 = vunpack.c.h.b16 %v235
    %v511 = vunpack.c.l.b16 %v236
    %v512 = vunpack.c.l.b16 %v237
    %v513 = vunpack.c.h.b16 %v237
    %v514 = vunpack.c.l.b16 %v238
    %v515 = vunpack.c.l.b16 %v239
    %v516 = vunpack.c.h.b16 %v239
    %v517 = vunpack.c.l.b16 %v240
    %v518 = vunpack.c.l.b16 %v241
    %v519 = vunpack.c.h.b16 %v241
    %v520 = vunpack.c.l.b16 %v242
    %v521 = vunpack.c.l.b16 %v243
    %v522 = vunpack.c.h.b16 %v243
    %v523 = vunpack.c.l.b16 %v244
    %v524 = vunpack.c.l.b16 %v245
    %v525 = vunpack.c.h.b16 %v245
    %v526 = vunpack.c.l.b16 %v246
    %v527 = vunpack.c.l.b16 %v247
    %v528 = vunpack.c.h.b16 %v247
    %v529 = vunpack.c.l.b16 %v248
    %v530 = vunpack.c.l.b16 %v249
    %v531 = vunpack.c.h.b16 %v249
    %v532 = vunpack.c.l.b16 %v250
    %v533 = vunpack.c.l.b16 %v251
    %v534 = vunpack.c.h.b16 %v251
    %v535 = vunpack.c.l.b16 %v252
    %v536 = vunpack.c.l.b16 %v253
    %v537 = vunpack.c.h.b16 %v253
    %v538 = vunpack.c.l.b16 %v254
    %v539 = vunpack.c.l.b16 %v255
    %v540 = vunpack.c.h.b16 %v255
    %v541 = vunpack.c.l.b16 %v256
    %v542 = vunpack.c.l.b16 %v257
    %v543 = vunpack.c.h.b16 %v257
    %v544 = vunpack.c.l.b16 %v258
    %v545 = vunpack.c.l.b16 %v259
    %v546 = vunpack.c.h.b16 %v259
    %v547 = vunpack.c.l.b16 %v260
    %v548 = vunpack.c.l.b16 %v261
    %v549 = vunpack.c.h.b16 %v261
    %v550 = vunpack.c.l.b16 %v262
    %v551 = vunpack.c.l.b16 %v263
    %v552 = vunpack.c.h.b16 %v263
    %v553 = vunpack.c.l.b16 %v264
    %v554 = vunpack.c.l.b16 %v265
    %v555 = vunpack.c.h.b16 %v265
    %v556 = vunpack.c.l.b16 %v266
    %v557 = vunpack.c.l.b16 %v267
    %v558 = vunpack.c.h.b16 %v267
    %v559 = vunpack.c.l.b16 %v268
    %v560 = vunpack.c.l.b16 %v269
    %v561 = vunpack.c.h.b16 %v269
    %v562 = vunpack.c.l.b16 %v270
    %v563 = vunpack.c.l.b16 %v271
    %v564 = vunpack.c.h.b16 %v271
    %v565 = vunpack.c.l.b16 %v272
    %v566 = vunpack.c.l.b16 %v273
    %v567 = vunpack.c.h.b16 %v273
    %v568 = vunpack.c.l.b16 %v274
    %v569 = vunpack.c.l.b16 %v275
    %v570 = vunpack.c.h.b16 %v275
    %v571 = vunpack.c.l.b16 %v276
    %v572 = vunpack.c.l.b16 %v277
    %v573 = vunpack.c.h.b16 %v277
    %v574 = vunpack.c.l.b16 %v278
    %v575 = vunpack.c.l.b16 %v279
    %v576 = vunpack.c.h.b16 %v279
    %v577 = vunpack.c.l.b16 %v280
    %v578 = vunpack.c.l.b16 %v281
    %v579 = vunpack.c.h.b16 %v281
    %v580 = vunpack.c.l.b16 %v282
    %v581 = vunpack.c.l.b16 %v283
    %v582 = vunpack.c.h.b16 %v283
    %v583 = vunpack.c.l.b16 %v284
    %v584 = vunpack.c.l.b16 %v285
    %v585 = vunpack.c.h.b16 %v285
    %v586 = vunpack.c.l.b16 %v286
    %v587 = vunpack.c.l.b16 %v287
    %v588 = vunpack.c.h.b16 %v287
    %v589 = vunpack.c.l.b16 %v288
    %v590 = vunpack.c.l.b16 %v289
    %v591 = vunpack.c.h.b16 %v289
    %v592 = vunpack.c.l.b16 %v290
    %v593 = vunpack.c.l.b16 %v291
    %v594 = vunpack.c.h.b16 %v291
    %v595 = vunpack.c.l.b16 %v292
    %v596 = vunpack.c.l.b16 %v293
    %v597 = vunpack.c.h.b16 %v293
    %v598 = vunpack.c.l.b16 %v294
    %v599 = vunpack.c.l.b16 %v295
    %v600 = vunpack.c.h.b16 %v295
    %v601 = vunpack.c.l.b16 %v296
    %v602 = vunpack.c.l.b16 %v297
    %v603 = vunpack.c.h.b16 %v297
    %v604 = vunpack.c.l.b16 %v298
    %v605 = vunpack.c.l.b16 %v299
    %v606 = vunpack.c.h.b16 %v299
    %v607 = vunpack.c.l.b16 %v300
    %v608 = vunpack.c.l.b16 %v301
    %v609 = vunpack.c.h.b16 %v301
    %v610 = vunpack.c.l.b16 %v302
    %v611 = vunpack.c.l.b16 %v303
    %v612 = vunpack.c.h.b16 %v303
    %v613 = vunpack.c.l.b16 %v304
    %v614 = vunpack.c.l.b16 %v305
    %v615 = vunpack.c.h.b16 %v305
    %v616 = vunpack.c.l.b16 %v306
    %v617 = vunpack.c.l.b16 %v307
    %v618 = vunpack.c.h.b16 %v307
    %v619 = vunpack.c.l.b16 %v308
    %v620 = vunpack.c.l.b16 %v309
    %v621 = vunpack.c.h.b16 %v309
    %v622 = vunpack.c.l.b16 %v310
    %v623 = vunpack.c.l.b16 %v311
    %v624 = vunpack.c.h.b16 %v311
    %v625 = vunpack.c.l.b16 %v312
    %v626 = vunpack.c.l.b16 %v313
    %v627 = vunpack.c.h.b16 %v313
    %v628 = vunpack.c.l.b16 %v314
    %v629 = vunpack.c.l.b16 %v315
    %v630 = vunpack.c.h.b16 %v315
    %v631 = vunpack.c.l.b16 %v316
    %v632 = vunpack.c.l.b16 %v317
    %v633 = vunpack.c.h.b16 %v317
    %v634 = vunpack.c.l.b16 %v318
    %v635 = vunpack.c.l.b16 %v319
    %v636 = vunpack.c.h.b16 %v319
    %v637 = vunpack.c.l.b16 %v320
    %v638 = vunpack.c.l.b16 %v321
    %v639 = vunpack.c.h.b16 %v321
    %v640 = vunpack.c.l.b16 %v322
    %v641 = vunpack.c.l.b16 %v323
    %v642 = vunpack.c.h.b16 %v323
    %v643 = vunpack.c.l.b16 %v324
    %v644 = vunpack.c.l.b16 %v325
    %v645 = vunpack.c.h.b16 %v325
    %v646 = vunpack.c.l.b16 %v326
    %v647 = vunpack.c.l.b16 %v327
    %v648 = vunpack.c.h.b16 %v327
    %v649 = vunpack.c.l.b16 %v328
    %v650 = vunpack.c.l.b16 %v329
    %v651 = vunpack.c.h.b16 %v329
    %v652 = vunpack.c.l.b16 %v330
    %v653 = vunpack.c.l.b16 %v331
    %v654 = vunpack.c.h.b16 %v331
    %v655 = vunpack.c.l.b16 %v332
    %v656 = vunpack.c.l.b16 %v333
    %v657 = vunpack.c.h.b16 %v333
    %v658 = vunpack.c.l.b16 %v334
    %v659 = vunpack.c.l.b16 %v335
    %v660 = vunpack.c.h.b16 %v335
    %v661 = vunpack.c.l.b16 %v336
    %v662 = vunpack.c.l.b16 %v337
    %v663 = vunpack.c.h.b16 %v337
    %v664 = vunpack.c.l.b16 %v338
    %v665 = vunpack.c.l.b16 %v339
    %v666 = vunpack.c.h.b16 %v339
    %v667 = vunpack.c.l.b16 %v340
    %v668 = vunpack.c.l.b16 %v341
    %v669 = vunpack.c.h.b16 %v341
    %v670 = vunpack.c.l.b16 %v342
    %v671 = vunpack.c.l.b16 %v343
    %v672 = vunpack.c.h.b16 %v343
    %v673 = vunpack.c.l.b16 %v344
    %v674 = vunpack.c.l.b16 %v345
    %v675 = vunpack.c.h.b16 %v345
    %v676 = vunpack.c.l.b16 %v346
    %v677 = vunpack.c.l.b16 %v347
    %v678 = vunpack.c.h.b16 %v347
    %v679 = vunpack.c.l.b16 %v348
    %v680 = vunpack.c.l.b16 %v349
    %v681 = vunpack.c.h.b16 %v349
    %v682 = vunpack.c.l.b16 %v350
    %v683 = vunpack.c.l.b16 %v351
    %v684 = vunpack.c.h.b16 %v351
    %v685 = vunpack.c.l.b16 %v352
    %v686 = vunpack.c.l.b16 %v353
    %v687 = vunpack.c.h.b16 %v353
    %v688 = vunpack.c.l.b16 %v354
    %v689 = vunpack.c.l.b16 %v355
    %v690 = vunpack.c.h.b16 %v355
    %v691 = vunpack.c.l.b16 %v356
    %v692 = vunpack.c.l.b16 %v357
    %v693 = vunpack.c.h.b16 %v357
    %v694 = vunpack.c.l.b16 %v358
    %v695 = vunpack.c.l.b16 %v359
    %v696 = vunpack.c.h.b16 %v359
    %v697 = vunpack.c.l.b16 %v360
    %v698 = vpack.c.b16 %v509, %v506
    %v699 = vpack.c.b16 %v510, %v507
    %v700 = vpack.c.b16 %v511, %v508
    %v701 = vpack.c.b16 %v515, %v512
    %v702 = vpack.c.b16 %v516, %v513
    %v703 = vpack.c.b16 %v517, %v514
    %v704 = vpack.c.b16 %v521, %v518
    %v705 = vpack.c.b16 %v522, %v519
    %v706 = vpack.c.b16 %v523, %v520
    %v707 = vpack.c.b16 %v527, %v524
    %v708 = vpack.c.b16 %v528, %v525
    %v709 = vpack.c.b16 %v529, %v526
    %v710 = vpack.c.b16 %v533, %v530
    %v711 = vpack.c.b16 %v534, %v531
    %v712 = vpack.c.b16 %v535, %v532
    %v713 = vpack.c.b16 %v539, %v536
    %v714 = vpack.c.b16 %v540, %v537
    %v715 = vpack.c.b16 %v541, %v538
    %v716 = vpack.c.b16 %v545, %v542
    %v717 = vpack.c.b16 %v546, %v543
    %v718 = vpack.c.b16 %v547, %v544
    %v719 = vpack.c.b16 %v551, %v548
    %v720 = vpack.c.b16 %v552, %v549
    %v721 = vpack.c.b16 %v553, %v550
    %v722 = vpack.c.b16 %v557, %v554
    %v723 = vpack.c.b16 %v558, %v555
    %v724 = vpack.c.b16 %v559, %v556
    %v725 = vpack.c.b16 %v563, %v560
    %v726 = vpack.c.b16 %v564, %v561
    %v727 = vpack.c.b16 %v565, %v562
    %v728 = vpack.c.b16 %v569, %v566
    %v729 = vpack.c.b16 %v570, %v567
    %v730 = vpack.c.b16 %v571, %v568
    %v731 = vpack.c.b16 %v575, %v572
    %v732 = vpack.c.b16 %v576, %v573
    %v733 = vpack.c.b16 %v577, %v574
    %v734 = vpack.c.b16 %v581, %v578
    %v735 = vpack.c.b16 %v582, %v579
    %v736 = vpack.c.b16 %v583, %v580
    %v737 = vpack.c.b16 %v587, %v584
    %v738 = vpack.c.b16 %v588, %v585
    %v739 = vpack.c.b16 %v589, %v586
    %v740 = vpack.c.b16 %v593, %v590
    %v741 = vpack.c.b16 %v594, %v591
    %v742 = vpack.c.b16 %v595, %v592
    %v743 = vpack.c.b16 %v599, %v596
    %v744 = vpack.c.b16 %v600, %v597
    %v745 = vpack.c.b16 %v601, %v598
    %v746 = vpack.c.b16 %v605, %v602
    %v747 = vpack.c.b16 %v606, %v603
    %v748 = vpack.c.b16 %v607, %v604
    %v749 = vpack.c.b16 %v611, %v608
    %v750 = vpack.c.b16 %v612, %v609
    %v751 = vpack.c.b16 %v613, %v610
    %v752 = vpack.c.b16 %v617, %v614
    %v753 = vpack.c.b16 %v618, %v615
    %v754 = vpack.c.b16 %v619, %v616
    %v755 = vpack.c.b16 %v623, %v620
    %v756 = vpack.c.b16 %v624, %v621
    %v757 = vpack.c.b16 %v625, %v622
    %v758 = vpack.c.b16 %v629, %v626
    %v759 = vpack.c.b16 %v630, %v627
    %v760 = vpack.c.b16 %v631, %v628
    %v761 = vpack.c.b16 %v635, %v632
    %v762 = vpack.c.b16 %v636, %v633
    %v763 = vpack.c.b16 %v637, %v634
    %v764 = vpack.c.b16 %v641, %v638
    %v765 = vpack.c.b16 %v642, %v639
    %v766 = vpack.c.b16 %v643, %v640
    %v767 = vpack.c.b16 %v647, %v644
    %v768 = vpack.c.b16 %v648, %v645
    %v769 = vpack.c.b16 %v649, %v646
    %v770 = vpack.c.b16 %v653, %v650
    %v771 = vpack.c.b16 %v654, %v651
    %v772 = vpack.c.b16 %v655, %v652
    %v773 = vpack.c.b16 %v659, %v656
    %v774 = vpack.c.b16 %v660, %v657
    %v775 = vpack.c.b16 %v661, %v658
    %v776 = vpack.c.b16 %v665, %v662
    %v777 = vpack.c.b16 %v666, %v663
    %v778 = vpack.c.b16 %v667, %v664
    %v779 = vpack.c.b16 %v671, %v668
    %v780 = vpack.c.b16 %v672, %v669
    %v781 = vpack.c.b16 %v673, %v670
    %v782 = vpack.c.b16 %v677, %v674
    %v783 = vpack.c.b16 %v678, %v675
    %v784 = vpack.c.b16 %v679, %v676
    %v785 = vpack.c.b16 %v683, %v680
    %v786 = vpack.c.b16 %v684, %v681
    %v787 = vpack.c.b16 %v685, %v682
    %v788 = vpack.c.b16 %v689, %v686
    %v789 = vpack.c.b16 %v690, %v687
    %v790 = vpack.c.b16 %v691, %v688
    %v791 = vpack.c.b16 %v695, %v692
    %v792 = vpack.c.b16 %v696, %v693
    %v793 = vpack.c.b16 %v697, %v694
    %890 = vmatprep.subr.bf16.mxu0 %v720
    %891 = vmatpush1.bf16.msra.mxu0 %v719
    %892 = vmatprep.subr.bf16.mxu0 %v717
    %893 = vmatpush1.bf16.msra.mxu0 %v716
    %894 = vmatprep.subr.bf16.mxu0 %v714
    %895 = vmatpush1.bf16.msra.mxu0 %v713
    %896 = vmatprep.subr.bf16.mxu0 %v711
    %897 = vmatpush1.bf16.msra.mxu0 %v710
    %898 = vmatprep.subr.bf16.mxu0 %v708
    %899 = vmatpush1.bf16.msra.mxu0 %v707
    %900 = vmatprep.subr.bf16.mxu0 %v705
    %901 = vmatpush1.bf16.msra.mxu0 %v704
    %902 = vmatprep.subr.bf16.mxu0 %v702
    %903 = vmatpush1.bf16.msra.mxu0 %v701
    %904 = vmatprep.subr.bf16.mxu0 %v699
    %905 = vmatpush1.bf16.msra.mxu0 %v698
    %906 = vmatprep.subr.bf16.mxu0 %v744
    %907 = vmatpush2.bf16.msra.mxu0 %v743
    %908 = vmatprep.subr.bf16.mxu0 %v741
    %909 = vmatpush2.bf16.msra.mxu0 %v740
    %910 = vmatprep.subr.bf16.mxu0 %v738
    %911 = vmatpush2.bf16.msra.mxu0 %v737
    %912 = vmatprep.subr.bf16.mxu0 %v735
    %913 = vmatpush2.bf16.msra.mxu0 %v734
    %914 = vmatprep.subr.bf16.mxu0 %v732
    %915 = vmatpush2.bf16.msra.mxu0 %v731
    %916 = vmatprep.subr.bf16.mxu0 %v729
    %917 = vmatpush2.bf16.msra.mxu0 %v728
    %918 = vmatprep.subr.bf16.mxu0 %v726
    %919 = vmatpush2.bf16.msra.mxu0 %v725
    %920 = vmatprep.subr.bf16.mxu0 %v723
    %921 = vmatpush2.bf16.msra.mxu0 %v722
    %922 = vmatprep.mubr.bf16.mxu0 %v230
    %923 = vmatmul.mubr.bf16.gmra.mxu0 %v229
    %v924 = vpop.f32.mrf.mxu0
    %v925 = vadd.f32 %v366, %v924
    %v926 = vpop.f32.mrf.mxu0
    %v927 = vadd.f32 %v370, %v926
    %v928 = vpop.f32.mrf.mxu0
    %v929 = vpop.f32.mrf.mxu0
    %930 = vdwg.mxu0
    %931 = vmatprep.subr.bf16.mxu0 %v768
    %932 = vmatpush1.bf16.msra.mxu0 %v767
    %933 = vmatprep.subr.bf16.mxu0 %v765
    %934 = vmatpush1.bf16.msra.mxu0 %v764
    %935 = vmatprep.subr.bf16.mxu0 %v762
    %936 = vmatpush1.bf16.msra.mxu0 %v761
    %937 = vmatprep.subr.bf16.mxu0 %v759
    %938 = vmatpush1.bf16.msra.mxu0 %v758
    %939 = vmatprep.subr.bf16.mxu0 %v756
    %940 = vmatpush1.bf16.msra.mxu0 %v755
    %941 = vmatprep.subr.bf16.mxu0 %v753
    %942 = vmatpush1.bf16.msra.mxu0 %v752
    %943 = vmatprep.subr.bf16.mxu0 %v750
    %944 = vmatpush1.bf16.msra.mxu0 %v749
    %945 = vmatprep.subr.bf16.mxu0 %v747
    %946 = vmatpush1.bf16.msra.mxu0 %v746
    %947 = vmatprep.subr.bf16.mxu0 %v792
    %948 = vmatpush2.bf16.msra.mxu0 %v791
    %949 = vmatprep.subr.bf16.mxu0 %v789
    %950 = vmatpush2.bf16.msra.mxu0 %v788
    %951 = vmatprep.subr.bf16.mxu0 %v786
    %952 = vmatpush2.bf16.msra.mxu0 %v785
    %953 = vmatprep.subr.bf16.mxu0 %v783
    %954 = vmatpush2.bf16.msra.mxu0 %v782
    %955 = vmatprep.subr.bf16.mxu0 %v780
    %956 = vmatpush2.bf16.msra.mxu0 %v779
    %957 = vmatprep.subr.bf16.mxu0 %v777
    %958 = vmatpush2.bf16.msra.mxu0 %v776
    %959 = vmatprep.subr.bf16.mxu0 %v774
    %960 = vmatpush2.bf16.msra.mxu0 %v773
    %961 = vmatprep.subr.bf16.mxu0 %v771
    %962 = vmatpush2.bf16.msra.mxu0 %v770
    %963 = vmatprep.mubr.bf16.mxu0 %v232
    %964 = vmatmul.mubr.bf16.gmra.mxu0 %v231
    %v965 = vpop.f32.mrf.mxu0
    %v966 = vadd.f32 %v925, %v965
    %v967 = vpop.f32.mrf.mxu0
    %v968 = vadd.f32 %v927, %v967
    %v969 = vpop.f32.mrf.mxu0
    %v970 = vpop.f32.mrf.mxu0
    %971 = vdwg.mxu0
    %972 = vmatprep.subr.bf16.mxu0 0
    %973 = vmatpush1.bf16.msra.mxu0 %v721
    %974 = vmatprep.subr.bf16.mxu0 0
    %975 = vmatpush1.bf16.msra.mxu0 %v718
    %976 = vmatprep.subr.bf16.mxu0 0
    %977 = vmatpush1.bf16.msra.mxu0 %v715
    %978 = vmatprep.subr.bf16.mxu0 0
    %979 = vmatpush1.bf16.msra.mxu0 %v712
    %980 = vmatprep.subr.bf16.mxu0 0
    %981 = vmatpush1.bf16.msra.mxu0 %v709
    %982 = vmatprep.subr.bf16.mxu0 0
    %983 = vmatpush1.bf16.msra.mxu0 %v706
    %984 = vmatprep.subr.bf16.mxu0 0
    %985 = vmatpush1.bf16.msra.mxu0 %v703
    %986 = vmatprep.subr.bf16.mxu0 0
    %987 = vmatpush1.bf16.msra.mxu0 %v700
    %988 = vmatprep.subr.bf16.mxu0 0
    %989 = vmatpush2.bf16.msra.mxu0 %v745
    %990 = vmatprep.subr.bf16.mxu0 0
    %991 = vmatpush2.bf16.msra.mxu0 %v742
    %992 = vmatprep.subr.bf16.mxu0 0
    %993 = vmatpush2.bf16.msra.mxu0 %v739
    %994 = vmatprep.subr.bf16.mxu0 0
    %995 = vmatpush2.bf16.msra.mxu0 %v736
    %996 = vmatprep.subr.bf16.mxu0 0
    %997 = vmatpush2.bf16.msra.mxu0 %v733
    %998 = vmatprep.subr.bf16.mxu0 0
    %999 = vmatpush2.bf16.msra.mxu0 %v730
    %1000 = vmatprep.subr.bf16.mxu0 0
    %1001 = vmatpush2.bf16.msra.mxu0 %v727
    %1002 = vmatprep.subr.bf16.mxu0 0
    %1003 = vmatpush2.bf16.msra.mxu0 %v724
    %1004 = vmatprep.mubr.bf16.mxu0 %v230
    %1005 = vmatmul.mubr.bf16.gmra.mxu0 %v229
    %v1006 = vpop.f32.mrf.mxu0
    %v1007 = vadd.f32 %v374, %v1006
    %v1008 = vpop.f32.mrf.mxu0
    %v1009 = vpop.f32.mrf.mxu0
    %v1010 = vpop.f32.mrf.mxu0
    %1011 = vdwg.mxu0
    %1012 = vmatprep.subr.bf16.mxu0 0
    %1013 = vmatpush1.bf16.msra.mxu0 %v769
    %1014 = vmatprep.subr.bf16.mxu0 0
    %1015 = vmatpush1.bf16.msra.mxu0 %v766
    %1016 = vmatprep.subr.bf16.mxu0 0
    %1017 = vmatpush1.bf16.msra.mxu0 %v763
    %1018 = vmatprep.subr.bf16.mxu0 0
    %1019 = vmatpush1.bf16.msra.mxu0 %v760
    %1020 = vmatprep.subr.bf16.mxu0 0
    %1021 = vmatpush1.bf16.msra.mxu0 %v757
    %1022 = vmatprep.subr.bf16.mxu0 0
    %1023 = vmatpush1.bf16.msra.mxu0 %v754
    %1024 = vmatprep.subr.bf16.mxu0 0
    %1025 = vmatpush1.bf16.msra.mxu0 %v751
    %1026 = vmatprep.subr.bf16.mxu0 0
    %1027 = vmatpush1.bf16.msra.mxu0 %v748
    %1028 = vmatprep.subr.bf16.mxu0 0
    %1029 = vmatpush2.bf16.msra.mxu0 %v793
    %1030 = vmatprep.subr.bf16.mxu0 0
    %1031 = vmatpush2.bf16.msra.mxu0 %v790
    %1032 = vmatprep.subr.bf16.mxu0 0
    %1033 = vmatpush2.bf16.msra.mxu0 %v787
    %1034 = vmatprep.subr.bf16.mxu0 0
    %1035 = vmatpush2.bf16.msra.mxu0 %v784
    %1036 = vmatprep.subr.bf16.mxu0 0
    %1037 = vmatpush2.bf16.msra.mxu0 %v781
    %1038 = vmatprep.subr.bf16.mxu0 0
    %1039 = vmatpush2.bf16.msra.mxu0 %v778
    %1040 = vmatprep.subr.bf16.mxu0 0
    %1041 = vmatpush2.bf16.msra.mxu0 %v775
    %1042 = vmatprep.subr.bf16.mxu0 0
    %1043 = vmatpush2.bf16.msra.mxu0 %v772
    %1044 = vmatprep.mubr.bf16.mxu0 %v232
    %1045 = vmatmul.mubr.bf16.gmra.mxu0 %v231
    %v1046 = vpop.f32.mrf.mxu0
    %v1047 = vadd.f32 %v1007, %v1046
    %v1048 = vpop.f32.mrf.mxu0
    %v1049 = vpop.f32.mrf.mxu0
    %v1050 = vpop.f32.mrf.mxu0
    %1051 = vdwg.mxu0
    %v1052 = vmax.f32 %v966, 0.0
    %v1053 = vmax.f32 %v968, 0.0
    %v1054 = vmax.f32 %v1047, 0.0
    %v1055 = vpack.c.bf16 %v1052, %v1052
    %v1056 = vpack.c.bf16 %v1053, %v1053
    %v1057 = vpack.c.bf16 %v1054, %v1054
    %v1058 = vld [vmem:[#allocation10] sm:$0xf]
    %v1059 = vld [vmem:[#allocation10 + $0x4] sm:$0xf]
    %v1060 = vld [vmem:[#allocation10 + $0x8] sm:$0xf]
    %v1061 = vld [vmem:[#allocation10 + $0xc] sm:$0xf]
    %v1062 = vld [vmem:[#allocation10 + $0x10] sm:$0xf]
    %v1063 = vld [vmem:[#allocation10 + $0x14] sm:$0xf]
    %v1064 = vld [vmem:[#allocation10 + $0x18] sm:$0xf]
    %v1065 = vld [vmem:[#allocation10 + $0x1c] sm:$0xf]
    %v1066 = vld [vmem:[#allocation10 + $0x20] sm:$0xf]
    %v1067 = vld [vmem:[#allocation10 + $0x24] sm:$0xf]
    %v1068 = vld [vmem:[#allocation10 + $0x28] sm:$0xf]
    %v1069 = vld [vmem:[#allocation10 + $0x2c] sm:$0xf]
    %v1070 = vld [vmem:[#allocation10 + $0x30] sm:$0xf]
    %v1071 = vld [vmem:[#allocation10 + $0x34] sm:$0xf]
    %v1072 = vld [vmem:[#allocation10 + $0x38] sm:$0xf]
    %v1073 = vld [vmem:[#allocation10 + $0x3c] sm:$0xf]
    %v1074 = vld [vmem:[#allocation10 + $0x40] sm:$0xf]
    %v1075 = vld [vmem:[#allocation10 + $0x44] sm:$0xf]
    %v1076 = vld [vmem:[#allocation10 + $0x48] sm:$0xf]
    %v1077 = vld [vmem:[#allocation10 + $0x4c] sm:$0xf]
    %v1078 = vld [vmem:[#allocation10 + $0x50] sm:$0xf]
    %v1079 = vld [vmem:[#allocation10 + $0x54] sm:$0xf]
    %v1080 = vld [vmem:[#allocation10 + $0x58] sm:$0xf]
    %v1081 = vld [vmem:[#allocation10 + $0x5c] sm:$0xf]
    %v1082 = vld [vmem:[#allocation10 + $0x60] sm:$0xf]
    %v1083 = vld [vmem:[#allocation10 + $0x64] sm:$0xf]
    %v1084 = vld [vmem:[#allocation10 + $0x68] sm:$0xf]
    %v1085 = vld [vmem:[#allocation10 + $0x6c] sm:$0xf]
    %v1086 = vld [vmem:[#allocation10 + $0x70] sm:$0xf]
    %v1087 = vld [vmem:[#allocation10 + $0x74] sm:$0xf]
    %v1088 = vld [vmem:[#allocation10 + $0x78] sm:$0xf]
    %v1089 = vld [vmem:[#allocation10 + $0x7c] sm:$0xf]
    %v1090 = vld [vmem:[#allocation10 + $0x80] sm:$0xf]
    %v1091 = vld [vmem:[#allocation10 + $0x84] sm:$0xf]
    %v1092 = vld [vmem:[#allocation10 + $0x88] sm:$0xf]
    %v1093 = vld [vmem:[#allocation10 + $0x8c] sm:$0xf]
    %v1094 = vld [vmem:[#allocation10 + $0x90] sm:$0xf]
    %v1095 = vld [vmem:[#allocation10 + $0x94] sm:$0xf]
    %v1096 = vld [vmem:[#allocation10 + $0x98] sm:$0xf]
    %v1097 = vld [vmem:[#allocation10 + $0x9c] sm:$0xf]
    %v1098 = vld [vmem:[#allocation10 + $0xa0] sm:$0xf]
    %v1099 = vld [vmem:[#allocation10 + $0xa4] sm:$0xf]
    %v1100 = vld [vmem:[#allocation10 + $0xa8] sm:$0xf]
    %v1101 = vld [vmem:[#allocation10 + $0xac] sm:$0xf]
    %v1102 = vld [vmem:[#allocation10 + $0xb0] sm:$0xf]
    %v1103 = vld [vmem:[#allocation10 + $0xb4] sm:$0xf]
    %v1104 = vld [vmem:[#allocation10 + $0xb8] sm:$0xf]
    %v1105 = vld [vmem:[#allocation10 + $0xbc] sm:$0xf]
    %v1106 = vld [vmem:[%s6] sm:$0x1]
    %v1108 = vlaneseq
    %v1109 = vshrl.u32 %v1108, 7
    %v1110 = vsub.s32 0, %v1109
    %v1111 = vrot.slane %v1106, %v1110
    %v1161 = vunpack.c.l.b16 %v1058
    %v1162 = vunpack.c.l.b16 %v1059
    %v1163 = vunpack.c.l.b16 %v1060
    %v1164 = vunpack.c.l.b16 %v1061
    %v1165 = vunpack.c.l.b16 %v1062
    %v1166 = vunpack.c.l.b16 %v1063
    %v1167 = vunpack.c.l.b16 %v1064
    %v1168 = vunpack.c.l.b16 %v1065
    %v1169 = vunpack.c.l.b16 %v1066
    %v1170 = vunpack.c.l.b16 %v1067
    %v1171 = vunpack.c.l.b16 %v1068
    %v1172 = vunpack.c.l.b16 %v1069
    %v1173 = vunpack.c.l.b16 %v1070
    %v1174 = vunpack.c.l.b16 %v1071
    %v1175 = vunpack.c.l.b16 %v1072
    %v1176 = vunpack.c.l.b16 %v1073
    %v1177 = vunpack.c.l.b16 %v1074
    %v1178 = vunpack.c.l.b16 %v1075
    %v1179 = vunpack.c.l.b16 %v1076
    %v1180 = vunpack.c.l.b16 %v1077
    %v1181 = vunpack.c.l.b16 %v1078
    %v1182 = vunpack.c.l.b16 %v1079
    %v1183 = vunpack.c.l.b16 %v1080
    %v1184 = vunpack.c.l.b16 %v1081
    %v1185 = vunpack.c.l.b16 %v1082
    %v1186 = vunpack.c.l.b16 %v1083
    %v1187 = vunpack.c.l.b16 %v1084
    %v1188 = vunpack.c.l.b16 %v1085
    %v1189 = vunpack.c.l.b16 %v1086
    %v1190 = vunpack.c.l.b16 %v1087
    %v1191 = vunpack.c.l.b16 %v1088
    %v1192 = vunpack.c.l.b16 %v1089
    %v1193 = vunpack.c.l.b16 %v1090
    %v1194 = vunpack.c.l.b16 %v1091
    %v1195 = vunpack.c.l.b16 %v1092
    %v1196 = vunpack.c.l.b16 %v1093
    %v1197 = vunpack.c.l.b16 %v1094
    %v1198 = vunpack.c.l.b16 %v1095
    %v1199 = vunpack.c.l.b16 %v1096
    %v1200 = vunpack.c.l.b16 %v1097
    %v1201 = vunpack.c.l.b16 %v1098
    %v1202 = vunpack.c.l.b16 %v1099
    %v1203 = vunpack.c.l.b16 %v1100
    %v1204 = vunpack.c.l.b16 %v1101
    %v1205 = vunpack.c.l.b16 %v1102
    %v1206 = vunpack.c.l.b16 %v1103
    %v1207 = vunpack.c.l.b16 %v1104
    %v1208 = vunpack.c.l.b16 %v1105
    %v1209 = vpack.c.b16 %v1162, %v1161
    %v1210 = vpack.c.b16 %v1164, %v1163
    %v1211 = vpack.c.b16 %v1166, %v1165
    %v1212 = vpack.c.b16 %v1168, %v1167
    %v1213 = vpack.c.b16 %v1170, %v1169
    %v1214 = vpack.c.b16 %v1172, %v1171
    %v1215 = vpack.c.b16 %v1174, %v1173
    %v1216 = vpack.c.b16 %v1176, %v1175
    %v1217 = vpack.c.b16 %v1178, %v1177
    %v1218 = vpack.c.b16 %v1180, %v1179
    %v1219 = vpack.c.b16 %v1182, %v1181
    %v1220 = vpack.c.b16 %v1184, %v1183
    %v1221 = vpack.c.b16 %v1186, %v1185
    %v1222 = vpack.c.b16 %v1188, %v1187
    %v1223 = vpack.c.b16 %v1190, %v1189
    %v1224 = vpack.c.b16 %v1192, %v1191
    %v1225 = vpack.c.b16 %v1194, %v1193
    %v1226 = vpack.c.b16 %v1196, %v1195
    %v1227 = vpack.c.b16 %v1198, %v1197
    %v1228 = vpack.c.b16 %v1200, %v1199
    %v1229 = vpack.c.b16 %v1202, %v1201
    %v1230 = vpack.c.b16 %v1204, %v1203
    %v1231 = vpack.c.b16 %v1206, %v1205
    %v1232 = vpack.c.b16 %v1208, %v1207
    %1257 = vmatprep.subr.bf16.mxu0 0
    %1258 = vmatpush1.bf16.msra.mxu0 %v1216
    %1259 = vmatprep.subr.bf16.mxu0 0
    %1260 = vmatpush1.bf16.msra.mxu0 %v1215
    %1261 = vmatprep.subr.bf16.mxu0 0
    %1262 = vmatpush1.bf16.msra.mxu0 %v1214
    %1263 = vmatprep.subr.bf16.mxu0 0
    %1264 = vmatpush1.bf16.msra.mxu0 %v1213
    %1265 = vmatprep.subr.bf16.mxu0 0
    %1266 = vmatpush1.bf16.msra.mxu0 %v1212
    %1267 = vmatprep.subr.bf16.mxu0 0
    %1268 = vmatpush1.bf16.msra.mxu0 %v1211
    %1269 = vmatprep.subr.bf16.mxu0 0
    %1270 = vmatpush1.bf16.msra.mxu0 %v1210
    %1271 = vmatprep.subr.bf16.mxu0 0
    %1272 = vmatpush1.bf16.msra.mxu0 %v1209
    %1273 = vmatprep.subr.bf16.mxu0 0
    %1274 = vmatpush2.bf16.msra.mxu0 %v1224
    %1275 = vmatprep.subr.bf16.mxu0 0
    %1276 = vmatpush2.bf16.msra.mxu0 %v1223
    %1277 = vmatprep.subr.bf16.mxu0 0
    %1278 = vmatpush2.bf16.msra.mxu0 %v1222
    %1279 = vmatprep.subr.bf16.mxu0 0
    %1280 = vmatpush2.bf16.msra.mxu0 %v1221
    %1281 = vmatprep.subr.bf16.mxu0 0
    %1282 = vmatpush2.bf16.msra.mxu0 %v1220
    %1283 = vmatprep.subr.bf16.mxu0 0
    %1284 = vmatpush2.bf16.msra.mxu0 %v1219
    %1285 = vmatprep.subr.bf16.mxu0 0
    %1286 = vmatpush2.bf16.msra.mxu0 %v1218
    %1287 = vmatprep.subr.bf16.mxu0 0
    %1288 = vmatpush2.bf16.msra.mxu0 %v1217
    %1289 = vmatprep.mubr.bf16.mxu0 %v1056
    %1290 = vmatmul.mubr.bf16.gmra.mxu0 %v1055
    %v1291 = vpop.f32.mrf.mxu0
    %v1292 = vadd.f32 %v1111, %v1291
    %v1293 = vpop.f32.mrf.mxu0
    %v1294 = vpop.f32.mrf.mxu0
    %v1295 = vpop.f32.mrf.mxu0
    %1296 = vdwg.mxu0
    %1297 = vmatprep.subr.bf16.mxu0 0
    %1298 = vmatpush1.bf16.msra.mxu0 %v1232
    %1299 = vmatprep.subr.bf16.mxu0 0
    %1300 = vmatpush1.bf16.msra.mxu0 %v1231
    %1301 = vmatprep.subr.bf16.mxu0 0
    %1302 = vmatpush1.bf16.msra.mxu0 %v1230
    %1303 = vmatprep.subr.bf16.mxu0 0
    %1304 = vmatpush1.bf16.msra.mxu0 %v1229
    %1305 = vmatprep.subr.bf16.mxu0 0
    %1306 = vmatpush1.bf16.msra.mxu0 %v1228
    %1307 = vmatprep.subr.bf16.mxu0 0
    %1308 = vmatpush1.bf16.msra.mxu0 %v1227
    %1309 = vmatprep.subr.bf16.mxu0 0
    %1310 = vmatpush1.bf16.msra.mxu0 %v1226
    %1311 = vmatprep.subr.bf16.mxu0 0
    %1312 = vmatpush1.bf16.msra.mxu0 %v1225
    %1313 = vmatprep.subr.bf16.mxu0 0
    %1314 = vmatpush2.bf16.msra.mxu0 0
    %1315 = vmatprep.subr.bf16.mxu0 0
    %1316 = vmatpush2.bf16.msra.mxu0 0
    %1317 = vmatprep.subr.bf16.mxu0 0
    %1318 = vmatpush2.bf16.msra.mxu0 0
    %1319 = vmatprep.subr.bf16.mxu0 0
    %1320 = vmatpush2.bf16.msra.mxu0 0
    %1321 = vmatprep.subr.bf16.mxu0 0
    %1322 = vmatpush2.bf16.msra.mxu0 0
    %1323 = vmatprep.subr.bf16.mxu0 0
    %1324 = vmatpush2.bf16.msra.mxu0 0
    %1325 = vmatprep.subr.bf16.mxu0 0
    %1326 = vmatpush2.bf16.msra.mxu0 0
    %1327 = vmatprep.subr.bf16.mxu0 0
    %1328 = vmatpush2.bf16.msra.mxu0 0
    %1329 = vmatprep.mubr.bf16.mxu0 0
    %1330 = vmatmul.mubr.bf16.gmra.mxu0 %v1057
    %v1331 = vpop.f32.mrf.mxu0
    %v1332 = vadd.f32 %v1292, %v1331
    %v1333 = vpop.f32.mrf.mxu0
    %v1334 = vpop.f32.mrf.mxu0
    %v1335 = vpop.f32.mrf.mxu0
    %1336 = vdwg.mxu0
    %v1337 = vtanh.pop %v1332
    %v1338 = vmul.f32 %v1337, 2.0
    %1339 = vst [vmem:[#allocation11] sm:$0xff] %v1338
    // Predicated region
    $region50: #{tpu_custom_call.1} parent=1 // pred_check
      _
    $region51: #{tpu_custom_call.1} parent=1 // pred_check_branch
      %1341 = sbr.rel (0) target = $region53
    $region52: #{tpu_custom_call.1} parent=1 // pred_region
      %s1343 = ssub.s32 128, 128
      %1344 = vsyncadd [#allocation4], %s1343
      %s1346 = sshll.u32 [#allocation11], 4
      %s1347 = int_to_ptr.vmem [resolvable:$true] %s1346
      %1349 = dma.vmem_to_hbm [thread:$0]  %s1347, 128, %s7, [#allocation4]
    $region53: #{tpu_custom_call.1} parent=1 // pred_fallthru
      _
    // Predicated region
    $region54: #{tpu_custom_call.1} parent=1 // pred_check
      _
    $region55: #{tpu_custom_call.1} parent=1 // pred_check_branch
      %1351 = sbr.rel (0) target = $region57
    $region56: #{tpu_custom_call.1} parent=1 // pred_region
      %1352 = dma.done [#allocation4], 128
    $region57: #{tpu_custom_call.1} parent=1 // pred_fallthru
      _
    %1353 = vsyncpa [#allocation3], 1
    %1354 = vsyncpa [#allocation6], 1
    %1355 = vsyncpa [#allocation9], 1
    %1356 = vsyncpa [#allocation4], 1

</llo_original>
